<compile_context>
chip_gen: v7x
topology: tpu7x:2x2x1
jax: 0.10.0
libtpu: 0.0.40
codegen_flags: <defaults>
</compile_context>

<pallas_src>
import numpy as np
import jax
import jax.numpy as jnp
from jax.experimental import pallas as pl
from jax.experimental.pallas import tpu as pltpu


# ----------------------------------------------------------------------------
# Kernels
# ----------------------------------------------------------------------------
def _sigma_group_kernel(x_ref, u_ref, out_ref):
    # x_ref : (tile, L)   L = G*T lanes (G independent sequences per row)
    # u_ref : (L, L)      block-diagonal upper-triangular kron(I_G, U_T)
    out_ref[...] = jnp.dot(
        x_ref[...], u_ref[...], preferred_element_type=jnp.float32
    ).astype(out_ref.dtype)


def _sigma_group_state_kernel(x_ref, s_ref, u_ref, e_ref, out_ref):
    # s_ref : (tile, G) previous state per packed sequence (float32)
    # e_ref : (G, L)    kron(I_G, 1_{1xT}) -> broadcasts state over time lanes
    cum = jnp.dot(x_ref[...], u_ref[...], preferred_element_type=jnp.float32)
    cum = cum + jnp.dot(s_ref[...], e_ref[...], preferred_element_type=jnp.float32)
    out_ref[...] = cum.astype(out_ref.dtype)


def _sigma_time_kernel(x_ref, u_ref, out_ref, carry_ref):
    # grid = (row_blocks, time_blocks); time innermost ("arbitrary")
    @pl.when(pl.program_id(1) == 0)
    def _():
        carry_ref[...] = jnp.zeros_like(carry_ref)

    cum = jnp.dot(x_ref[...], u_ref[...], preferred_element_type=jnp.float32)
    cum = cum + carry_ref[...]
    out_ref[...] = cum.astype(out_ref.dtype)
    carry_ref[...] = cum[:, -1:]


def _sigma_time_state_kernel(x_ref, s_ref, u_ref, out_ref, carry_ref):
    @pl.when(pl.program_id(1) == 0)
    def _():
        carry_ref[...] = s_ref[...]          # state already float32

    cum = jnp.dot(x_ref[...], u_ref[...], preferred_element_type=jnp.float32)
    cum = cum + carry_ref[...]
    out_ref[...] = cum.astype(out_ref.dtype)
    carry_ref[...] = cum[:, -1:]


# ----------------------------------------------------------------------------
# Tiling helpers
# ----------------------------------------------------------------------------
_MAX_ROW_TILE = 8192       # 8192 x 128 f32 block ~ 4 MiB -> step overhead < ~10%
_MIN_ROW_TILE = 512
_TARGET_ROW_BLOCKS = 4     # keep >=4 grid steps so DMA overlaps compute


def _round_up(x, m):
    return ((x + m - 1) // m) * m


def _tpu_kind():
    try:
        return jax.devices()[0].device_kind.lower()
    except Exception:
        return ""


def _budgets():
    """(vmem_limit_bytes, per-block budget bytes), generation aware."""
    kind = _tpu_kind()
    if ("v5" in kind) or ("v6" in kind):
        # 128 MiB VMEM per TensorCore -> generous budgets.
        return 96 * 1024 * 1024, 64 * 1024 * 1024
    # v7x (64 MiB VMEM per TC) or unknown generation -> conservative.
    return 48 * 1024 * 1024, 32 * 1024 * 1024


def _pick_row_tile(num_rows, lane_width, bpe_in, bpe_out, block_budget):
    """Largest row tile whose double-buffered in/out blocks + f32 intermediate
    fit the budget, while keeping several grid steps alive for pipelining."""
    # 2x-buffered x block + 2x-buffered out block + f32 matmul intermediate.
    per_row = lane_width * (2 * bpe_in + 2 * bpe_out + 4)
    cap = int(block_budget // per_row)
    cap = max(8, min(cap, _MAX_ROW_TILE))
    cap = (cap // 8) * 8                        # sublane multiple
    # Don't collapse the grid to a single block: aim for >=_TARGET_ROW_BLOCKS.
    desired = -(-num_rows // _TARGET_ROW_BLOCKS)
    desired = max(_MIN_ROW_TILE, _round_up(desired, 8))
    tile = min(cap, desired, _round_up(num_rows, 8))
    return max(8, tile)


# ----------------------------------------------------------------------------
# pallas_call builders
# ----------------------------------------------------------------------------
def _sigma_grouped_call(x2, s2, group, out_dtype, vmem_limit, block_budget):
    """Small-T path: x2 is (M, L) with L = group*T = 128 lanes, one time block."""
    M, L = x2.shape
    T = L // group
    dtype = x2.dtype
    bpe = jnp.dtype(dtype).itemsize
    bpe_out = jnp.dtype(out_dtype).itemsize
    tile = _pick_row_tile(M, L, bpe, bpe_out, block_budget)
    grid = (pl.cdiv(M, tile),)

    # Block-diagonal upper-triangular cumsum matrix, built once (VMEM resident).
    U = jnp.asarray(np.kron(np.eye(group), np.triu(np.ones((T, T)))), dtype=dtype)

    x_spec = pl.BlockSpec((tile, L), lambda i: (i, 0))
    u_spec = pl.BlockSpec((L, L), lambda i: (0, 0))
    out_spec = pl.BlockSpec((tile, L), lambda i: (i, 0))

    flops = 2 * M * L * L
    bytes_accessed = M * L * (bpe + bpe_out) + L * L * bpe

    if s2 is None:
        kernel = _sigma_group_kernel
        in_specs = [x_spec, u_spec]
        args = (x2, U)
    else:
        # State kept in float32; E is float32 so the state add is exact.
        E = jnp.asarray(np.kron(np.eye(group), np.ones((1, T))), dtype=jnp.float32)
        s_spec = pl.BlockSpec((tile, group), lambda i: (i, 0))
        e_spec = pl.BlockSpec((group, L), lambda i: (0, 0))
        kernel = _sigma_group_state_kernel
        in_specs = [x_spec, s_spec, u_spec, e_spec]
        args = (x2, s2, U, E)
        flops += 2 * M * group * L
        bytes_accessed += (M * group + group * L) * 4

    return pl.pallas_call(
        kernel,
        out_shape=jax.ShapeDtypeStruct((M, L), out_dtype),
        grid=grid,
        in_specs=in_specs,
        out_specs=out_spec,
        compiler_params=pltpu.CompilerParams(
            dimension_semantics=("parallel",),
            vmem_limit_bytes=vmem_limit,
        ),
        cost_estimate=pl.CostEstimate(
            flops=int(flops), transcendentals=0, bytes_accessed=int(bytes_accessed)),
    )(*args)


def _sigma_time_tiled_call(x2, s2, t_blk, out_dtype, vmem_limit, block_budget):
    """Large-T path: x2 is (N, T), time tiled in t_blk chunks with a f32 carry."""
    N, T = x2.shape
    dtype = x2.dtype
    bpe = jnp.dtype(dtype).itemsize
    bpe_out = jnp.dtype(out_dtype).itemsize
    tile = _pick_row_tile(N, t_blk, bpe, bpe_out, block_budget)
    grid = (pl.cdiv(N, tile), T // t_blk)

    U = jnp.asarray(np.triu(np.ones((t_blk, t_blk))), dtype=dtype)

    x_spec = pl.BlockSpec((tile, t_blk), lambda i, t: (i, t))
    u_spec = pl.BlockSpec((t_blk, t_blk), lambda i, t: (0, 0))
    out_spec = pl.BlockSpec((tile, t_blk), lambda i, t: (i, t))

    flops = 2 * N * T * t_blk
    bytes_accessed = N * T * (bpe + bpe_out) + t_blk * t_blk * bpe

    if s2 is None:
        kernel = _sigma_time_kernel
        in_specs = [x_spec, u_spec]
        args = (x2, U)
    else:
        s_spec = pl.BlockSpec((tile, 1), lambda i, t: (i, 0))
        kernel = _sigma_time_state_kernel
        in_specs = [x_spec, s_spec, u_spec]
        args = (x2, s2, U)
        bytes_accessed += N * 4

    return pl.pallas_call(
        kernel,
        out_shape=jax.ShapeDtypeStruct((N, T), out_dtype),
        grid=grid,
        in_specs=in_specs,
        out_specs=out_spec,
        scratch_shapes=[pltpu.VMEM((tile, 1), jnp.float32)],
        compiler_params=pltpu.CompilerParams(
            dimension_semantics=("parallel", "arbitrary"),
            vmem_limit_bytes=vmem_limit,
        ),
        cost_estimate=pl.CostEstimate(
            flops=int(flops), transcendentals=0, bytes_accessed=int(bytes_accessed)),
    )(*args)


# ----------------------------------------------------------------------------
# Public forward
# ----------------------------------------------------------------------------
def sigma_forward(x, pre_state=None, persistent_state=False):
    """Pallas implementation of Sigma.forward.

    x         : [B, *spatial, T] array
    pre_state : [B, *spatial] array or None (treated as zeros, as on first call)
    Returns (output, new_pre_state); new_pre_state is None when
    persistent_state is False (mirrors the PyTorch module).
    """
    orig_shape = x.shape
    if x.ndim < 3:
        raise AssertionError(
            "Expected input to have at least 3 dimensions: "
            f"[Batch, Spatial dims ..., Time]. Its shape is {x.shape}.")
    T = int(orig_shape[-1])
    N = int(np.prod(orig_shape[:-1]))
    x2 = x.reshape(N, T)

    # pre_state is zeros on the module's first call, so skipping it is exact.
    use_state = bool(persistent_state) and pre_state is not None
    s_flat = pre_state.reshape(N).astype(jnp.float32) if use_state else None

    vmem_limit, block_budget = _budgets()
    is_v5 = "v5" in _tpu_kind()

    if T >= 128:
        # Time-tiled regime; pad ragged T to a multiple of 128 (exact for
        # cumsum, sliced off below) so stores stay lane-dense.
        Tp = _round_up(T, 128)
        # 128 keeps the kernel memory-bound on every generation (and matches
        # v5e's 128x128 MXU); 256 only when it matches the 256x256 MXU in bf16.
        if (not is_v5) and x.dtype == jnp.bfloat16 and Tp % 256 == 0:
            t_blk = 256
        else:
            t_blk = 128
        x2p = x2 if Tp == T else jnp.pad(x2, ((0, 0), (0, Tp - T)))
        s2 = s_flat.reshape(N, 1) if use_state else None
        out2 = _sigma_time_tiled_call(x2p, s2, t_blk, x.dtype,
                                      vmem_limit, block_budget)
        if Tp != T:
            out2 = out2[:, :T]
    else:
        # Grouped regime: pad T to a power-of-two divisor of 128 and rows to a
        # multiple of the group so every lane block is full (unmasked stores).
        Tp = 1 if T <= 1 else (1 << (T - 1).bit_length())
        group = 128 // Tp
        Np = _round_up(N, group)
        if Tp != T or Np != N:
            x2p = jnp.pad(x2, ((0, Np - N), (0, Tp - T)))
        else:
            x2p = x2
        M = Np // group
        x2g = x2p.reshape(M, group * Tp)
        if use_state:
            s_p = s_flat if Np == N else jnp.pad(s_flat, (0, Np - N))
            s2 = s_p.reshape(M, group)
        else:
            s2 = None
        out2g = _sigma_grouped_call(x2g, s2, group, x.dtype,
                                    vmem_limit, block_budget)
        out2 = out2g.reshape(Np, Tp)
        if Tp != T or Np != N:
            out2 = out2[:N, :T]

    output = out2.reshape(orig_shape)
    if persistent_state:
        # Last *valid* time column (pad columns already sliced away above).
        new_state = output[..., -1]
        return output, new_state
    return output, None


# ----------------------------------------------------------------------------
# Self-test
# ----------------------------------------------------------------------------
if __name__ == "__main__":
    key = jax.random.PRNGKey(0)
    k1, k2, k3, k4, k5, k6 = jax.random.split(key, 6)

    # --- Small-T (grouped / lane-dense) path: [Batch=2, C=4, Spatial=16, T=16]
    x = jax.random.normal(k1, (2, 4, 16, 16), dtype=jnp.float32)
    out, _ = sigma_forward(x, persistent_state=False)
    out = jax.block_until_ready(out)
    ref = jnp.cumsum(x, axis=-1)
    np.testing.assert_allclose(np.asarray(out), np.asarray(ref),
                               rtol=1e-5, atol=1e-5)

    pre = jax.random.normal(k2, (2, 4, 16), dtype=jnp.float32)
    out_p, st = sigma_forward(x, pre_state=pre, persistent_state=True)
    out_p = jax.block_until_ready(out_p)
    st = jax.block_until_ready(st)
    ref_p = jnp.cumsum(x, axis=-1) + pre[..., None]
    np.testing.assert_allclose(np.asarray(out_p), np.asarray(ref_p),
                               rtol=1e-5, atol=1e-5)
    np.testing.assert_allclose(np.asarray(st), np.asarray(ref_p[..., -1]),
                               rtol=1e-5, atol=1e-5)

    # --- Ragged small-T (pads T=12 -> 16, rows 30 -> 32): [2, 3, 5, 12]
    y = jax.random.normal(k3, (2, 3, 5, 12), dtype=jnp.float32)
    out_y, _ = sigma_forward(y, persistent_state=False)
    out_y = jax.block_until_ready(out_y)
    np.testing.assert_allclose(np.asarray(out_y), np.asarray(jnp.cumsum(y, -1)),
                               rtol=1e-5, atol=1e-5)

    # --- Large-T (time-tiled, carried prefix) path with state: [2, 8, 512]
    z = jax.random.normal(k4, (2, 8, 512), dtype=jnp.float32)
    pre_z = jax.random.normal(k5, (2, 8), dtype=jnp.float32)
    out_z, st_z = sigma_forward(z, pre_state=pre_z, persistent_state=True)
    out_z = jax.block_until_ready(out_z)
    st_z = jax.block_until_ready(st_z)
    ref_z = jnp.cumsum(z, axis=-1) + pre_z[..., None]
    np.testing.assert_allclose(np.asarray(out_z), np.asarray(ref_z),
                               rtol=1e-5, atol=1e-4)
    np.testing.assert_allclose(np.asarray(st_z), np.asarray(ref_z[..., -1]),
                               rtol=1e-5, atol=1e-4)

    # --- Ragged large-T (pads 200 -> 256): [2, 4, 200]
    w = jax.random.normal(k6, (2, 4, 200), dtype=jnp.float32)
    out_w, _ = sigma_forward(w, persistent_state=False)
    out_w = jax.block_until_ready(out_w)
    np.testing.assert_allclose(np.asarray(out_w), np.asarray(jnp.cumsum(w, -1)),
                               rtol=1e-5, atol=1e-4)

    print("KERNEL_OK")
</pallas_src>

<mosaic_0001>
module attributes {stable_mosaic.version = 11 : i64} {
  func.func @_sigma_group_kernel(%arg0: i32, %arg1: memref<16x128xf32, #tpu.memory_space<vmem>>, %arg2: memref<128x128xf32, #tpu.memory_space<vmem>>, %arg3: memref<16x128xf32, #tpu.memory_space<vmem>>) attributes {dimension_semantics = [#tpu.dimension_semantics<parallel>], iteration_bounds = array<i64: 1>, scalar_prefetch = 0 : i64, scratch_operands = 0 : i64, tpu.core_type = #tpu.core_type<tc>, window_params = [{transform_indices = @transform_0, window_bounds = array<i64: 16, 128>}, {pipeline_mode = #tpu.pipeline_mode<synchronous>, transform_indices = @transform_1, window_bounds = array<i64: 128, 128>}, {transform_indices = @transform_2, window_bounds = array<i64: 16, 128>}]} {
    %c0 = arith.constant 0 : index
    %c0_0 = arith.constant 0 : index
    %0 = vector.load %arg1[%c0, %c0_0] : memref<16x128xf32, #tpu.memory_space<vmem>>, vector<16x128xf32>
    %c0_1 = arith.constant 0 : index
    %c0_2 = arith.constant 0 : index
    %1 = vector.load %arg2[%c0_1, %c0_2] : memref<128x128xf32, #tpu.memory_space<vmem>>, vector<128x128xf32>
    %cst = arith.constant dense<0.000000e+00> : vector<16x128xf32>
    %2 = tpu.matmul %0, %1, %cst {dimension_numbers = #tpu.dot_dimension_numbers<[1], [0], [0], [1], [0, 0, 1, 1], [], []>} : vector<16x128xf32>, vector<128x128xf32>, vector<16x128xf32> -> vector<16x128xf32>
    %c0_3 = arith.constant 0 : index
    %c0_4 = arith.constant 0 : index
    %3 = vector.load %arg3[%c0_3, %c0_4] : memref<16x128xf32, #tpu.memory_space<vmem>>, vector<16x128xf32>
    tpu.vector_store %arg3[%c0_3, %c0_4], %2 {strides = array<i32>} : memref<16x128xf32, #tpu.memory_space<vmem>>, vector<16x128xf32>,
    return
  }
  func.func @transform_0(%arg0: i32) -> (i32, i32) {
    %c0_i32 = arith.constant 0 : i32
    %c0_i32_0 = arith.constant 0 : i32
    return %arg0, %c0_i32 : i32, i32
  }
  func.func @transform_1(%arg0: i32) -> (i32, i32) {
    %c0_i32 = arith.constant 0 : i32
    %c0_i32_0 = arith.constant 0 : i32
    %c0_i32_1 = arith.constant 0 : i32
    return %c0_i32, %c0_i32_0 : i32, i32
  }
  func.func @transform_2(%arg0: i32) -> (i32, i32) {
    %c0_i32 = arith.constant 0 : i32
    %c0_i32_0 = arith.constant 0 : i32
    return %arg0, %c0_i32 : i32, i32
  }
}

</mosaic_0001>

<llo_original>
// kernel: tpu_custom_call.1
$region0: #{tpu_custom_call.1}
  #allocation0 [shape = 'u32[]', space=smem, size = 0x4, offset = 0x4, fixed_abs, tag = 'smem constant byte address 0x4 - core index']
  #allocation1 [shape = 'u32[144,128]{1,0:T(1,128)}', space=vmem, size = 0x12000, scoped, tag = 'internal scratch']
  %s0 = inlined_call_operand.hbm [shape: f32[16,128], index: 0, kind: input, shape index: {}]
  %s1 = inlined_call_operand.hbm [shape: f32[128,128], index: 1, kind: input, shape index: {}]
  %s2 = inlined_call_operand.hbm [shape: f32[16,128], index: 2, kind: output, shape index: {}]
  %s3 = sld [smem:[#allocation0]]
  $region26: #{tpu_custom_call.1} parent=0
    _
  %s5 = ssub.s32 1, %s3
  %s6 = scalar_select 0, %s5, %s3
  $region1: #{tpu_custom_call.1} parent=0
    #allocation2 [shape = 'u8[8192]{0}', space=vmem, size = 0x2000, scoped, tag = 'input window, operand 0, single buffered']
    #allocation3 [shape = 's32[1]{0}', space=sflag, size = 0x4, scoped, tag = 'scoped memory for tpu_custom_call.1']
    #allocation4 [shape = 's32[1]{0}', space=sflag, size = 0x4, scoped, tag = 'scoped memory for tpu_custom_call.1']
    #allocation5 [shape = 'u8[65536]{0}', space=vmem, size = 0x10000, scoped, tag = 'input window, operand 1, single buffered']
    #allocation6 [shape = 's32[1]{0}', space=sflag, size = 0x4, scoped, tag = 'scoped memory for tpu_custom_call.1']
    #allocation7 [shape = 'u8[8192]{0}', space=vmem, size = 0x2000, scoped, tag = 'output window, operand 0, single buffered']
    %7 = vsyncpa [#allocation3], 0
    %8 = vsyncpa [#allocation6], 0
    %9 = vsyncpa [#allocation4], 0
    // Predicated region
    $region2: #{tpu_custom_call.1} parent=1 // pred_check
      _
    $region3: #{tpu_custom_call.1} parent=1 // pred_check_branch
      %11 = sbr.rel (0) target = $region5
    $region4: #{tpu_custom_call.1} parent=1 // pred_region
      %s13 = ssub.s32 256, 256
      %14 = vsyncadd [#allocation3], %s13
      %s15 = sshll.u32 [#allocation2], 4
      %s16 = int_to_ptr.vmem [resolvable:$true] %s15
      %21 = dma.hbm_to_vmem [thread:$0]  %s0, 256, %s16, [#allocation3], 128, 128, 8
    $region5: #{tpu_custom_call.1} parent=1 // pred_fallthru
      _
    // Predicated region
    $region6: #{tpu_custom_call.1} parent=1 // pred_check
      _
    $region7: #{tpu_custom_call.1} parent=1 // pred_check_branch
      %23 = sbr.rel (0) target = $region9
    $region8: #{tpu_custom_call.1} parent=1 // pred_region
      %s25 = ssub.s32 2048, 2048
      %26 = vsyncadd [#allocation6], %s25
      %s27 = sshll.u32 [#allocation5], 4
      %s28 = int_to_ptr.vmem [resolvable:$true] %s27
      %33 = dma.hbm_to_vmem [thread:$0]  %s1, 2048, %s28, [#allocation6], 128, 128, 8
    $region9: #{tpu_custom_call.1} parent=1 // pred_fallthru
      _
    // Predicated region
    $region10: #{tpu_custom_call.1} parent=1 // pred_check
      _
    $region11: #{tpu_custom_call.1} parent=1 // pred_check_branch
      %35 = sbr.rel (0) target = $region13
    $region12: #{tpu_custom_call.1} parent=1 // pred_region
      %36 = dma.done [#allocation3], 256
    $region13: #{tpu_custom_call.1} parent=1 // pred_fallthru
      _
    // Predicated region
    $region14: #{tpu_custom_call.1} parent=1 // pred_check
      _
    $region15: #{tpu_custom_call.1} parent=1 // pred_check_branch
      %38 = sbr.rel (0) target = $region17
    $region16: #{tpu_custom_call.1} parent=1 // pred_region
      %39 = dma.done [#allocation6], 2048
    $region17: #{tpu_custom_call.1} parent=1 // pred_fallthru
      _
    %v40 = vld [vmem:[#allocation2] sm:$0xff]
    %v41 = vld [vmem:[#allocation2 + $0x8] sm:$0xff]
    %v42 = vld [vmem:[#allocation5] sm:$0xff]
    %v43 = vld [vmem:[#allocation5 + $0x8] sm:$0xff]
    %v44 = vld [vmem:[#allocation5 + $0x10] sm:$0xff]
    %v45 = vld [vmem:[#allocation5 + $0x18] sm:$0xff]
    %v46 = vld [vmem:[#allocation5 + $0x20] sm:$0xff]
    %v47 = vld [vmem:[#allocation5 + $0x28] sm:$0xff]
    %v48 = vld [vmem:[#allocation5 + $0x30] sm:$0xff]
    %v49 = vld [vmem:[#allocation5 + $0x38] sm:$0xff]
    %v50 = vld [vmem:[#allocation5 + $0x40] sm:$0xff]
    %v51 = vld [vmem:[#allocation5 + $0x48] sm:$0xff]
    %v52 = vld [vmem:[#allocation5 + $0x50] sm:$0xff]
    %v53 = vld [vmem:[#allocation5 + $0x58] sm:$0xff]
    %v54 = vld [vmem:[#allocation5 + $0x60] sm:$0xff]
    %v55 = vld [vmem:[#allocation5 + $0x68] sm:$0xff]
    %v56 = vld [vmem:[#allocation5 + $0x70] sm:$0xff]
    %v57 = vld [vmem:[#allocation5 + $0x78] sm:$0xff]
    %58 = vmatprep.subr.mxu0 0.0
    %59 = vmatpush1.msra.mxu0 %v42
    %60 = vmatprep.subr.mxu0 0.0
    %61 = vmatpush1.msra.mxu0 %v43
    %62 = vmatprep.subr.mxu0 0.0
    %63 = vmatpush1.msra.mxu0 %v44
    %64 = vmatprep.subr.mxu0 0.0
    %65 = vmatpush1.msra.mxu0 %v45
    %66 = vmatprep.subr.mxu0 0.0
    %67 = vmatpush1.msra.mxu0 %v46
    %68 = vmatprep.subr.mxu0 0.0
    %69 = vmatpush1.msra.mxu0 %v47
    %70 = vmatprep.subr.mxu0 0.0
    %71 = vmatpush1.msra.mxu0 %v48
    %72 = vmatprep.subr.mxu0 0.0
    %73 = vmatpush1.msra.mxu0 %v49
    %74 = vmatprep.subr.mxu0 0.0
    %75 = vmatpush1.msra.mxu0 %v50
    %76 = vmatprep.subr.mxu0 0.0
    %77 = vmatpush1.msra.mxu0 %v51
    %78 = vmatprep.subr.mxu0 0.0
    %79 = vmatpush1.msra.mxu0 %v52
    %80 = vmatprep.subr.mxu0 0.0
    %81 = vmatpush1.msra.mxu0 %v53
    %82 = vmatprep.subr.mxu0 0.0
    %83 = vmatpush1.msra.mxu0 %v54
    %84 = vmatprep.subr.mxu0 0.0
    %85 = vmatpush1.msra.mxu0 %v55
    %86 = vmatprep.subr.mxu0 0.0
    %87 = vmatpush1.msra.mxu0 %v56
    %88 = vmatprep.subr.mxu0 0.0
    %89 = vmatpush1.msra.mxu0 %v57
    %90 = vmatprep.subr.mxu0 0.0
    %91 = vmatpush1.msra.mxu0 0.0
    %92 = vmatprep.subr.mxu0 0.0
    %93 = vmatpush1.msra.mxu0 0.0
    %94 = vmatprep.subr.mxu0 0.0
    %95 = vmatpush1.msra.mxu0 0.0
    %96 = vmatprep.subr.mxu0 0.0
    %97 = vmatpush1.msra.mxu0 0.0
    %98 = vmatprep.subr.mxu0 0.0
    %99 = vmatpush1.msra.mxu0 0.0
    %100 = vmatprep.subr.mxu0 0.0
    %101 = vmatpush1.msra.mxu0 0.0
    %102 = vmatprep.subr.mxu0 0.0
    %103 = vmatpush1.msra.mxu0 0.0
    %104 = vmatprep.subr.mxu0 0.0
    %105 = vmatpush1.msra.mxu0 0.0
    %106 = vmatprep.subr.mxu0 0.0
    %107 = vmatpush1.msra.mxu0 0.0
    %108 = vmatprep.subr.mxu0 0.0
    %109 = vmatpush1.msra.mxu0 0.0
    %110 = vmatprep.subr.mxu0 0.0
    %111 = vmatpush1.msra.mxu0 0.0
    %112 = vmatprep.subr.mxu0 0.0
    %113 = vmatpush1.msra.mxu0 0.0
    %114 = vmatprep.subr.mxu0 0.0
    %115 = vmatpush1.msra.mxu0 0.0
    %116 = vmatprep.subr.mxu0 0.0
    %117 = vmatpush1.msra.mxu0 0.0
    %118 = vmatprep.subr.mxu0 0.0
    %119 = vmatpush1.msra.mxu0 0.0
    %120 = vmatprep.subr.mxu0 0.0
    %121 = vmatpush1.msra.mxu0 0.0
    %122 = vmatprep.mubr.f32.mxu0 0.0
    %123 = vmatmul.mubr.f32.gmra.mrb[0].mxu0 %v40
    %v124 = vpop.f32.mrb[0].mxu0
    %v125 = vadd.f32 0.0, %v124
    %v126 = vpop.f32.mrb[0].mxu0
    %127 = vmatprep.mubr.f32.mxu0 0.0
    %128 = vmatmul.mubr.f32.gmra.mrb[0].mxu0 %v41
    %v129 = vpop.f32.mrb[0].mxu0
    %v130 = vadd.f32 0.0, %v129
    %v131 = vpop.f32.mrb[0].mxu0
    %132 = vdwg.mxu0
    %133 = vst [vmem:[#allocation7] sm:$0xff] %v125
    %134 = vst [vmem:[#allocation7 + $0x8] sm:$0xff] %v130
    // Predicated region
    $region18: #{tpu_custom_call.1} parent=1 // pred_check
      _
    $region19: #{tpu_custom_call.1} parent=1 // pred_check_branch
      %136 = sbr.rel (0) target = $region21
    $region20: #{tpu_custom_call.1} parent=1 // pred_region
      %s138 = ssub.s32 256, 256
      %139 = vsyncadd [#allocation4], %s138
      %s140 = sshll.u32 [#allocation7], 4
      %s141 = int_to_ptr.vmem [resolvable:$true] %s140
      %146 = dma.vmem_to_hbm [thread:$0]  %s141, 256, %s2, [#allocation4], 128, 128, 8
    $region21: #{tpu_custom_call.1} parent=1 // pred_fallthru
      _
    // Predicated region
    $region22: #{tpu_custom_call.1} parent=1 // pred_check
      _
    $region23: #{tpu_custom_call.1} parent=1 // pred_check_branch
      %148 = sbr.rel (0) target = $region25
    $region24: #{tpu_custom_call.1} parent=1 // pred_region
      %149 = dma.done [#allocation4], 256
    $region25: #{tpu_custom_call.1} parent=1 // pred_fallthru
      _
    %150 = vsyncpa [#allocation3], 1
    %151 = vsyncpa [#allocation6], 1
    %152 = vsyncpa [#allocation4], 1

</llo_original>
